<compile_context>
chip_gen: v6e
topology: v6e:2x2x1
jax: 0.10.0
libtpu: 0.0.40
codegen_flags: <defaults>
</compile_context>

<pallas_src>
import jax
import jax.numpy as jnp
from jax import lax
from jax.experimental import pallas as pl
from jax.experimental.pallas import tpu as pltpu


def cdiv(a, b):
    return (a + b - 1) // b


def _gather_embed_kernel(sched_ref, idx_ref, zt0_ref, zt1_ref, b_ref, out_ref):
    # sched_ref : SMEM [2, num_tiles] int32; row 0 = window block start (units of
    #             row_tile) for this tile, row 1 = number of occupied slots.
    # idx_ref   : [1, TR]  int32  per-slot source index RELATIVE to the tile's
    #                             aligned window start (in [0, 2*TR)); -1 == empty.
    # zt0_ref   : [E, TR]  bf16   window block 0 of z_sorted.T
    # zt1_ref   : [E, TR]  bf16   window block 1 of z_sorted.T (next block)
    # b_ref     : [E, 1]   bf16   bias column
    # out_ref   : [E, TR]          transposed output tile (lane-dense stores)
    i = pl.program_id(0)
    cnt = sched_ref[1, i]
    emb_dim, tr = out_ref.shape
    bias = b_ref[...].astype(jnp.float32)                         # [E, 1]

    @pl.when(cnt == 0)
    def _():
        # No point landed in this tile: every slot is Linear(0) == bias.
        out_ref[...] = jnp.broadcast_to(bias, (emb_dim, tr)).astype(out_ref.dtype)

    @pl.when(cnt > 0)
    def _():
        idx = idx_ref[...]                                        # [1, TR]
        # onehot[k, t] = (window row k == idx[t]).  idx == -1 never matches a
        # non-negative row index -> all-zero column -> empty slot contributes 0
        # and then picks up the bias (matches Linear(zero coords)).
        row = lax.broadcasted_iota(jnp.int32, (tr, tr), 0)
        oh0 = (row == idx).astype(jnp.bfloat16)                   # rows [0, TR)
        oh1 = ((row + tr) == idx).astype(jnp.bfloat16)            # rows [TR, 2TR)
        # [E, TR] @ [TR, TR] on the MXU (bf16 operands, f32 accumulate).
        acc = jnp.dot(zt0_ref[...], oh0, preferred_element_type=jnp.float32)
        acc = acc + jnp.dot(zt1_ref[...], oh1, preferred_element_type=jnp.float32)
        out_ref[...] = (acc + bias).astype(out_ref.dtype)


def psh3d_coord_embedding(coords, seps, hash_op, *, w, b, bucket_size, alignment,
                          feat_dtype=jnp.bfloat16, row_tile=512,
                          transposed_output=False):
    """Pallas implementation of PSH3DCoordEmbedding.forward.

    coords: [N, 3] f32, seps: per-batch end offsets, w: [3, E], b: [E].
    Returns [pad_to, E] (or [E, pad_to] if transposed_output) in feat_dtype,
    with pad_to = cdiv(N, alignment) * alignment.
    """
    n = coords.shape[0]
    emb_dim = w.shape[1]
    tr = int(row_tile)
    assert tr % 128 == 0, "row_tile must be a multiple of 128 (lane-dense output)"

    pad_to = cdiv(n, alignment) * alignment
    num_buckets = pad_to // bucket_size
    pad_slots = cdiv(pad_to, tr) * tr
    num_tiles = pad_slots // tr

    # ---- glue: batch_bucket_scatter slot assignment (data dependent) ----
    point_ids = jnp.arange(n, dtype=jnp.int32)
    batch_id = jnp.searchsorted(seps, point_ids, side="right").astype(jnp.int32)
    h = hash_op(coords, batch_id).astype(jnp.uint32)
    bucket = (h % jnp.uint32(num_buckets)).astype(jnp.int32)            # [N]

    # Within-bucket rank via stable sort + segmented cum-count (O(N log N)).
    order = jnp.argsort(bucket, stable=True)
    sorted_bucket = bucket[order]
    pos = jnp.arange(n, dtype=jnp.int32)
    is_start = jnp.concatenate(
        [jnp.ones((1,), jnp.bool_), sorted_bucket[1:] != sorted_bucket[:-1]])
    seg_start = lax.cummax(jnp.where(is_start, pos, 0))
    rank = jnp.zeros((n,), jnp.int32).at[order].set(pos - seg_start)

    kept = rank < bucket_size
    # Destination slot per point; dropped (overflow) points -> sentinel pad_slots.
    dest = jnp.where(kept, bucket * bucket_size + rank, pad_slots)

    # Compact all points in destination-slot order (dropped points sort last).
    perm = jnp.argsort(dest, stable=True)
    dest_perm = dest[perm]                                               # sorted

    # ---- per-tile source windows (band-limited contraction) ----
    tiles = jnp.arange(num_tiles, dtype=jnp.int32)
    tile_lo = jnp.searchsorted(dest_perm, tiles * tr, side="left").astype(jnp.int32)
    tile_hi = jnp.searchsorted(dest_perm, (tiles + 1) * tr, side="left").astype(jnp.int32)
    blk_start = tile_lo // tr            # aligned window block start (units of tr)
    cnt = tile_hi - tile_lo              # occupied slots per tile (<= tr)
    sched = jnp.stack([blk_start, cnt]).astype(jnp.int32)                # [2, num_tiles]

    # Per-slot source index, relative to the tile's aligned window start; -1 = empty.
    src_of_slot = jnp.full((pad_slots,), -1, jnp.int32).at[dest_perm].set(
        jnp.arange(n, dtype=jnp.int32), mode="drop")
    slot_tile = jnp.arange(pad_slots, dtype=jnp.int32) // tr
    rel = jnp.where(src_of_slot >= 0, src_of_slot - blk_start[slot_tile] * tr, -1)
    gather_idx = rel.reshape(1, pad_slots)                               # lane-dense

    # ---- one dense [N,3]x[3,E] matmul in the wrapper, produced transposed ----
    src_pad = (n // tr + 2) * tr         # room for the "+1" window block at the end
    coords_perm = coords[perm].astype(jnp.bfloat16)                      # [N, 3]
    zt = jnp.einsum("nk,ke->en", coords_perm, w.astype(jnp.bfloat16),
                    preferred_element_type=jnp.float32).astype(jnp.bfloat16)  # [E, N]
    zt = jnp.pad(zt, ((0, 0), (0, src_pad - n)))                         # [E, src_pad]
    b_col = jnp.reshape(b, (emb_dim, 1)).astype(jnp.bfloat16)

    out_t = pl.pallas_call(
        _gather_embed_kernel,
        out_shape=jax.ShapeDtypeStruct((emb_dim, pad_slots), feat_dtype),
        grid_spec=pltpu.PrefetchScalarGridSpec(
            num_scalar_prefetch=1,
            grid=(num_tiles,),
            in_specs=[
                pl.BlockSpec((1, tr), lambda i, s: (0, i)),                   # slot idx
                pl.BlockSpec((emb_dim, tr), lambda i, s: (0, s[0, i])),       # zT win 0
                pl.BlockSpec((emb_dim, tr), lambda i, s: (0, s[0, i] + 1)),   # zT win 1
                pl.BlockSpec((emb_dim, 1), lambda i, s: (0, 0)),              # bias
            ],
            out_specs=pl.BlockSpec((emb_dim, tr), lambda i, s: (0, i)),
        ),
        compiler_params=pltpu.CompilerParams(
            dimension_semantics=("parallel",),
            vmem_limit_bytes=32 * 1024 * 1024,
        ),
    )(sched, gather_idx, zt, zt, b_col)

    out_t = out_t[:, :pad_to]
    if transposed_output:
        return out_t                       # [E, pad_to] — skips the wrapper transpose
    return out_t.T                         # module-faithful [pad_to, E]


if __name__ == "__main__":
    key = jax.random.PRNGKey(0)
    k_coords, k_w, k_b = jax.random.split(key, 3)

    # Module hyper-params (small, synthetic)
    emb_dim = 32
    bucket_size = 8
    alignment = 32
    n_points = 300
    # pad_to = cdiv(300, 32) * 32 = 320 ; num_buckets = 40
    # row_tile = 256 -> pad_slots = 512 -> grid = (2,)  (>= 2 even steps for v7x)

    coords = jax.random.uniform(k_coords, (n_points, 3), jnp.float32,
                                minval=-1.0, maxval=1.0)
    seps = jnp.array([150, n_points], dtype=jnp.int32)   # end offsets of 2 batches

    # te.Linear(3, emb_dim): torch stores weight as [emb_dim, 3]; we keep the
    # transposed [3, emb_dim] for row-major matmul.
    w = (jax.random.normal(k_w, (3, emb_dim), jnp.float32)
         * (1.0 / jnp.sqrt(3.0))).astype(jnp.bfloat16)
    b = (jax.random.normal(k_b, (emb_dim,), jnp.float32) * 0.01).astype(jnp.bfloat16)

    def hash_op(c, batch_id):
        # Simple PSH-style spatial hash (quantize -> prime multiply -> xor),
        # mixed with the batch id so batches land in distinct bucket patterns.
        q = jnp.floor(c * 16.0).astype(jnp.int32).astype(jnp.uint32)      # [N, 3]
        primes = jnp.array([73856093, 19349663, 83492791], dtype=jnp.uint32)
        hq = q * primes[None, :]
        hh = hq[:, 0] ^ hq[:, 1] ^ hq[:, 2]
        hh = hh ^ (batch_id.astype(jnp.uint32) * jnp.uint32(2654435761))
        return hh

    out = psh3d_coord_embedding(coords, seps, hash_op, w=w, b=b,
                                bucket_size=bucket_size, alignment=alignment,
                                row_tile=256)
    out = jax.block_until_ready(out)

    pad_to = cdiv(n_points, alignment) * alignment
    assert out.shape == (pad_to, emb_dim), out.shape
    assert out.dtype == jnp.bfloat16, out.dtype

    # Pure-JAX reference: rebuild the bucket-scattered coords with the same
    # slot-assignment policy and apply the Linear directly.
    def reference(coords, seps):
        n = coords.shape[0]
        pid = jnp.arange(n, dtype=jnp.int32)
        bid = jnp.searchsorted(seps, pid, side="right").astype(jnp.int32)
        hh = hash_op(coords, bid).astype(jnp.uint32)
        nb = pad_to // bucket_size
        bk = (hh % jnp.uint32(nb)).astype(jnp.int32)
        order = jnp.argsort(bk, stable=True)
        sb = bk[order]
        pos = jnp.arange(n, dtype=jnp.int32)
        is_start = jnp.concatenate([jnp.ones((1,), jnp.bool_), sb[1:] != sb[:-1]])
        seg_start = lax.cummax(jnp.where(is_start, pos, 0))
        rank = jnp.zeros((n,), jnp.int32).at[order].set(pos - seg_start)
        valid = rank < bucket_size
        dest = jnp.where(valid, bk * bucket_size + rank, pad_to)
        cond = jnp.zeros((pad_to, 3), coords.dtype).at[dest].set(coords, mode="drop")
        y = jnp.dot(cond.astype(jnp.bfloat16), w,
                    preferred_element_type=jnp.float32) + b.astype(jnp.float32)
        return y.astype(jnp.bfloat16)

    ref = jax.block_until_ready(reference(coords, seps))
    err = float(jnp.max(jnp.abs(out.astype(jnp.float32) - ref.astype(jnp.float32))))
    assert err < 0.1, err   # bf16 rounding tolerance (z rounded once before gather)

    print("KERNEL_OK")
</pallas_src>

<mosaic_0001>
module attributes {stable_mosaic.version = 11 : i64} {
  func.func @_gather_embed_kernel(%arg0: i32, %arg1: memref<2x2xi32, #tpu.memory_space<smem>>, %arg2: memref<1x256xi32, #tpu.memory_space<vmem>>, %arg3: memref<32x256xbf16, #tpu.memory_space<vmem>>, %arg4: memref<32x256xbf16, #tpu.memory_space<vmem>>, %arg5: memref<32x1xbf16, #tpu.memory_space<vmem>>, %arg6: memref<32x256xbf16, #tpu.memory_space<vmem>>) attributes {dimension_semantics = [#tpu.dimension_semantics<parallel>], iteration_bounds = array<i64: 2>, scalar_prefetch = 1 : i64, scratch_operands = 0 : i64, tpu.core_type = #tpu.core_type<tc>, window_params = [{transform_indices = @transform_0, window_bounds = array<i64: 1, 256>}, {transform_indices = @transform_1, window_bounds = array<i64: 32, 256>}, {transform_indices = @transform_2, window_bounds = array<i64: 32, 256>}, {pipeline_mode = #tpu.pipeline_mode<synchronous>, transform_indices = @transform_3, window_bounds = array<i64: 32, 1>}, {transform_indices = @transform_4, window_bounds = array<i64: 32, 256>}]} {
    %c1 = arith.constant 1 : index
    %0 = arith.index_cast %arg0 : i32 to index
    %1 = memref.load %arg1[%c1, %0] : memref<2x2xi32, #tpu.memory_space<smem>>
    %c0 = arith.constant 0 : index
    %c0_0 = arith.constant 0 : index
    %2 = vector.load %arg5[%c0, %c0_0] : memref<32x1xbf16, #tpu.memory_space<vmem>>, vector<32x1xbf16>
    %3 = arith.extf %2 : vector<32x1xbf16> to vector<32x1xf32>
    %c0_i32 = arith.constant 0 : i32
    %4 = arith.cmpi eq, %1, %c0_i32 : i32
    %5 = arith.extui %4 : i1 to i32
    %c0_i32_1 = arith.constant 0 : i32
    %6 = arith.cmpi ne, %5, %c0_i32_1 : i32
    scf.if %6 {
      %10 = vector.shape_cast %3 : vector<32x1xf32> to vector<32x1xf32>
      %11 = vector.broadcast %10 : vector<32x1xf32> to vector<32x256xf32>
      %12 = arith.truncf %11 : vector<32x256xf32> to vector<32x256xbf16>
      %c0_4 = arith.constant 0 : index
      %c0_5 = arith.constant 0 : index
      %13 = vector.load %arg6[%c0_4, %c0_5] : memref<32x256xbf16, #tpu.memory_space<vmem>>, vector<32x256xbf16>
      tpu.vector_store %arg6[%c0_4, %c0_5], %12 {strides = array<i32>} : memref<32x256xbf16, #tpu.memory_space<vmem>>, vector<32x256xbf16>,
    } else {
    }
    %c0_i32_2 = arith.constant 0 : i32
    %7 = arith.cmpi sgt, %1, %c0_i32_2 : i32
    %8 = arith.extui %7 : i1 to i32
    %c0_i32_3 = arith.constant 0 : i32
    %9 = arith.cmpi ne, %8, %c0_i32_3 : i32
    scf.if %9 {
      %c0_4 = arith.constant 0 : index
      %c0_5 = arith.constant 0 : index
      %10 = vector.load %arg2[%c0_4, %c0_5] : memref<1x256xi32, #tpu.memory_space<vmem>>, vector<1x256xi32>
      %11 = tpu.iota {dimensions = array<i32: 0>} : vector<256x256xi32>
      %12 = vector.broadcast %10 : vector<1x256xi32> to vector<256x256xi32>
      %13 = arith.cmpi eq, %11, %12 : vector<256x256xi32>
      %14 = arith.extui %13 : vector<256x256xi1> to vector<256x256xi32>
      %15 = arith.sitofp %14 : vector<256x256xi32> to vector<256x256xf32>
      %16 = arith.truncf %15 : vector<256x256xf32> to vector<256x256xbf16>
      %c256_i32 = arith.constant 256 : i32
      %17 = vector.broadcast %c256_i32 : i32 to vector<256x256xi32>
      %18 = arith.addi %11, %17 : vector<256x256xi32>
      %19 = vector.broadcast %10 : vector<1x256xi32> to vector<256x256xi32>
      %20 = arith.cmpi eq, %18, %19 : vector<256x256xi32>
      %21 = arith.extui %20 : vector<256x256xi1> to vector<256x256xi32>
      %22 = arith.sitofp %21 : vector<256x256xi32> to vector<256x256xf32>
      %23 = arith.truncf %22 : vector<256x256xf32> to vector<256x256xbf16>
      %c0_6 = arith.constant 0 : index
      %c0_7 = arith.constant 0 : index
      %24 = vector.load %arg3[%c0_6, %c0_7] : memref<32x256xbf16, #tpu.memory_space<vmem>>, vector<32x256xbf16>
      %cst = arith.constant dense<0.000000e+00> : vector<32x256xf32>
      %25 = tpu.matmul %24, %16, %cst {dimension_numbers = #tpu.dot_dimension_numbers<[1], [0], [0], [1], [0, 0, 1, 1], [], []>} : vector<32x256xbf16>, vector<256x256xbf16>, vector<32x256xf32> -> vector<32x256xf32>
      %c0_8 = arith.constant 0 : index
      %c0_9 = arith.constant 0 : index
      %26 = vector.load %arg4[%c0_8, %c0_9] : memref<32x256xbf16, #tpu.memory_space<vmem>>, vector<32x256xbf16>
      %cst_10 = arith.constant dense<0.000000e+00> : vector<32x256xf32>
      %27 = tpu.matmul %26, %23, %cst_10 {dimension_numbers = #tpu.dot_dimension_numbers<[1], [0], [0], [1], [0, 0, 1, 1], [], []>} : vector<32x256xbf16>, vector<256x256xbf16>, vector<32x256xf32> -> vector<32x256xf32>
      %28 = arith.addf %25, %27 : vector<32x256xf32>
      %29 = vector.broadcast %3 : vector<32x1xf32> to vector<32x256xf32>
      %30 = arith.addf %28, %29 : vector<32x256xf32>
      %31 = arith.truncf %30 : vector<32x256xf32> to vector<32x256xbf16>
      %c0_11 = arith.constant 0 : index
      %c0_12 = arith.constant 0 : index
      %32 = vector.load %arg6[%c0_11, %c0_12] : memref<32x256xbf16, #tpu.memory_space<vmem>>, vector<32x256xbf16>
      tpu.vector_store %arg6[%c0_11, %c0_12], %31 {strides = array<i32>} : memref<32x256xbf16, #tpu.memory_space<vmem>>, vector<32x256xbf16>,
    } else {
    }
    return
  }
  func.func @transform_0(%arg0: i32, %arg1: memref<2x2xi32, #tpu.memory_space<smem>>) -> (i32, i32) {
    %c0_i32 = arith.constant 0 : i32
    %c0_i32_0 = arith.constant 0 : i32
    return %c0_i32, %arg0 : i32, i32
  }
  func.func @transform_1(%arg0: i32, %arg1: memref<2x2xi32, #tpu.memory_space<smem>>) -> (i32, i32) {
    %c0 = arith.constant 0 : index
    %0 = arith.index_cast %arg0 : i32 to index
    %1 = memref.load %arg1[%c0, %0] : memref<2x2xi32, #tpu.memory_space<smem>>
    %c0_i32 = arith.constant 0 : i32
    %c0_i32_0 = arith.constant 0 : i32
    return %c0_i32, %1 : i32, i32
  }
  func.func @transform_2(%arg0: i32, %arg1: memref<2x2xi32, #tpu.memory_space<smem>>) -> (i32, i32) {
    %c0 = arith.constant 0 : index
    %0 = arith.index_cast %arg0 : i32 to index
    %1 = memref.load %arg1[%c0, %0] : memref<2x2xi32, #tpu.memory_space<smem>>
    %c1_i32 = arith.constant 1 : i32
    %2 = arith.addi %1, %c1_i32 : i32
    %c0_i32 = arith.constant 0 : i32
    %c0_i32_0 = arith.constant 0 : i32
    return %c0_i32, %2 : i32, i32
  }
  func.func @transform_3(%arg0: i32, %arg1: memref<2x2xi32, #tpu.memory_space<smem>>) -> (i32, i32) {
    %c0_i32 = arith.constant 0 : i32
    %c0_i32_0 = arith.constant 0 : i32
    %c0_i32_1 = arith.constant 0 : i32
    return %c0_i32, %c0_i32_0 : i32, i32
  }
  func.func @transform_4(%arg0: i32, %arg1: memref<2x2xi32, #tpu.memory_space<smem>>) -> (i32, i32) {
    %c0_i32 = arith.constant 0 : i32
    %c0_i32_0 = arith.constant 0 : i32
    return %c0_i32, %arg0 : i32, i32
  }
}

</mosaic_0001>

<llo_original>
// kernel: tpu_custom_call.1
$region0: #{tpu_custom_call.1}
  #allocation0 [shape = 'u32[]', space=smem, size = 0x4, offset = 0x4, fixed_abs, tag = 'smem constant byte address 0x4 - core index']
  #allocation1 [shape = 'u32[144,128]{1,0:T(1,128)}', space=vmem, size = 0x12000, scoped, tag = 'internal scratch']
  #allocation2 [shape = 's32[1]{0}', space=sflag, size = 0x4, scoped, tag = 'scoped memory for tpu_custom_call.1']
  #allocation3 [shape = 'u8[1024]{0}', space=smem, size = 0x400, scoped, tag = 'prefetched SMEM operand 0']
  %s0 = inlined_call_operand.vmem [shape: s32[2,2], index: 0, kind: input, shape index: {}]
  %s1 = inlined_call_operand.vmem [shape: s32[1,512], index: 1, kind: input, shape index: {}]
  %s2 = inlined_call_operand.hbm [shape: bf16[32,768], index: 2, kind: input, shape index: {}]
  %s3 = inlined_call_operand.hbm [shape: bf16[32,768], index: 3, kind: input, shape index: {}]
  %s4 = inlined_call_operand.vmem [shape: bf16[32,1], index: 4, kind: input, shape index: {}]
  %s5 = inlined_call_operand.hbm [shape: bf16[32,512], index: 5, kind: output, shape index: {}]
  %s6 = sld [smem:[#allocation0]]
  $region65: #{tpu_custom_call.1} parent=0
    _
  %s8 = ssub.s32 1, %s6
  %s9 = scalar_select 0, %s8, %s6
  %s10 = sshll.u32 %s0, 4
  %s11 = int_to_ptr.vmem [resolvable:$true] %s10
  %13 = dma.vmem_to_smem %s11, 32, [#allocation3], [#allocation2]
  %14 = dma.done [#allocation2], 32
  %15 = sfence
  $region1: #{tpu_custom_call.1} parent=0
    #allocation4 [shape = 'u8[32768]{0}', space=vmem, size = 0x8000, scoped, tag = 'input window, operand 2']
    #allocation5 [shape = 's32[2]{0}', space=sflag, size = 0x8, scoped, tag = 'scoped memory for tpu_custom_call.1']
    #allocation6 [shape = 's32[2]{0}', space=sflag, size = 0x8, scoped, tag = 'scoped memory for tpu_custom_call.1']
    #allocation7 [shape = 'u8[32768]{0}', space=vmem, size = 0x8000, scoped, tag = 'input window, operand 3']
    #allocation8 [shape = 's32[2]{0}', space=sflag, size = 0x8, scoped, tag = 'scoped memory for tpu_custom_call.1']
    #allocation9 [shape = 'u8[32768]{0}', space=vmem, size = 0x8000, scoped, tag = 'output window, operand 0']
    %16 = vsyncpa [#allocation5], 0
    %s17 = scalar_lea.sflag [#allocation5], 1
    %18 = vsyncpa %s17, 0
    %19 = vsyncpa [#allocation8], 0
    %s20 = scalar_lea.sflag [#allocation8], 1
    %21 = vsyncpa %s20, 0
    %22 = vsyncpa [#allocation6], 0
    %s23 = scalar_lea.sflag [#allocation6], 1
    %24 = vsyncpa %s23, 0
    loop: start=0, step=1, limit=4
    $region2: #{tpu_custom_call.1} parent=1 // loop_pre_header
      _
    $region3: #{tpu_custom_call.1} parent=1 // loop_header
      %s26 = sphi 0, %s30
      %p27 = scmp.ge.s32.totalorder %s26, 4
      %s36 = sphi 0, %s38
      %s39 = sphi 0, %s36
      %s40 = sphi 0, %s39
      %s56 = sphi 0, %s40
      %s64 = sphi 0, %s66
      %s67 = sphi 0, %s64
      %s68 = sphi 0, %s67
      %s84 = sphi 0, %s68
      %s94 = sphi 0, %s96
      %s97 = sphi 0, %s94
      %s98 = sphi 0, %s97
      %s114 = sphi 0, %s98
      %s118 = sphi 0, %s118
      %s120 = sphi 0, %s118
      %s121 = sphi 0, %s120
      %s135 = sphi 0, %s121
      %s141 = sphi 0, %s143
      %s144 = sphi 0, %s141
      %s145 = sphi 0, %s144
      %s161 = sphi 0, %s145
    $region4: #{tpu_custom_call.1} parent=1 // loop_header_branch
      %29 = sbr.rel (%p27) target = $region8
    $region5: #{tpu_custom_call.1} parent=1 // loop_body
      %s31 = ssub.s32 %s26, 1
      %s32 = ssub.s32 %s26, 2
      %s33 = sadd.s32 %s26, 1
      %s34 = ssub.s32 %s26, %s33
      %p35 = scmp.eq.s32.totalorder %s34, 0
      %s37 = sadd.s32 %s36, 1
      %s38 = scalar_select %p35, %s36, %s37
      %p41 = pneg %p35
      %p42 = scmp.eq.s32.totalorder %s26, 1
      %p43 = por %p41, %p42
      %p44 = scmp.ne.s32.totalorder %s36, %s39
      %p45 = scmp.eq.s32.totalorder %s26, 0
      %p46 = por %p44, %p45
      %p47 = scmp.ne.s32.totalorder %s36, %s39
      %p48 = scmp.eq.s32.totalorder %s31, 1
      %p49 = por %p47, %p48
      %p50 = scmp.ne.s32.totalorder %s39, %s40
      %p51 = scmp.eq.s32.totalorder %s31, 0
      %p52 = por %p50, %p51
      %p53 = scmp.ne.s32.totalorder %s39, %s40
      %p54 = scmp.eq.s32.totalorder %s32, 1
      %p55 = por %p53, %p54
      %p57 = scmp.ne.s32.totalorder %s40, %s56
      %p58 = scmp.eq.s32.totalorder %s32, 0
      %p59 = por %p57, %p58
      %s60 = sld [smem:[#allocation3 + %s26]]
      %s61 = sld [smem:[#allocation3 + %s33]]
      %s62 = ssub.s32 %s60, %s61
      %p63 = scmp.eq.s32.totalorder %s62, 0
      %s65 = sadd.s32 %s64, 1
      %s66 = scalar_select %p63, %s64, %s65
      %p69 = pneg %p63
      %p70 = scmp.eq.s32.totalorder %s26, 1
      %p71 = por %p69, %p70
      %p72 = scmp.ne.s32.totalorder %s64, %s67
      %p73 = scmp.eq.s32.totalorder %s26, 0
      %p74 = por %p72, %p73
      %p75 = scmp.ne.s32.totalorder %s64, %s67
      %p76 = scmp.eq.s32.totalorder %s31, 1
      %p77 = por %p75, %p76
      %p78 = scmp.ne.s32.totalorder %s67, %s68
      %p79 = scmp.eq.s32.totalorder %s31, 0
      %p80 = por %p78, %p79
      %p81 = scmp.ne.s32.totalorder %s67, %s68
      %p82 = scmp.eq.s32.totalorder %s32, 1
      %p83 = por %p81, %p82
      %p85 = scmp.ne.s32.totalorder %s68, %s84
      %p86 = scmp.eq.s32.totalorder %s32, 0
      %p87 = por %p85, %p86
      %s88 = sld [smem:[#allocation3 + %s26]]
      %s89 = sadd.s32 %s88, 1
      %s90 = sld [smem:[#allocation3 + %s33]]
      %s91 = sadd.s32 %s90, 1
      %s92 = ssub.s32 %s89, %s91
      %p93 = scmp.eq.s32.totalorder %s92, 0
      %s95 = sadd.s32 %s94, 1
      %s96 = scalar_select %p93, %s94, %s95
      %p99 = pneg %p93
      %p100 = scmp.eq.s32.totalorder %s26, 1
      %p101 = por %p99, %p100
      %p102 = scmp.ne.s32.totalorder %s94, %s97
      %p103 = scmp.eq.s32.totalorder %s26, 0
      %p104 = por %p102, %p103
      %p105 = scmp.ne.s32.totalorder %s94, %s97
      %p106 = scmp.eq.s32.totalorder %s31, 1
      %p107 = por %p105, %p106
      %p108 = scmp.ne.s32.totalorder %s97, %s98
      %p109 = scmp.eq.s32.totalorder %s31, 0
      %p110 = por %p108, %p109
      %p111 = scmp.ne.s32.totalorder %s97, %s98
      %p112 = scmp.eq.s32.totalorder %s32, 1
      %p113 = por %p111, %p112
      %p115 = scmp.ne.s32.totalorder %s98, %s114
      %p116 = scmp.eq.s32.totalorder %s32, 0
      %p117 = por %p115, %p116
      %s119 = sadd.s32 %s118, 1
      %p122 = scmp.eq.s32.totalorder %s26, 1
      %p123 = scmp.ne.s32.totalorder %s118, %s120
      %p124 = scmp.eq.s32.totalorder %s26, 0
      %p125 = por %p123, %p124
      %p126 = scmp.ne.s32.totalorder %s118, %s120
      %p127 = scmp.eq.s32.totalorder %s31, 1
      %p128 = por %p126, %p127
      %p129 = scmp.ne.s32.totalorder %s120, %s121
      %p130 = scmp.eq.s32.totalorder %s31, 0
      %p131 = por %p129, %p130
      %p132 = scmp.ne.s32.totalorder %s120, %s121
      %p133 = scmp.eq.s32.totalorder %s32, 1
      %p134 = por %p132, %p133
      %p136 = scmp.ne.s32.totalorder %s121, %s135
      %p137 = scmp.eq.s32.totalorder %s32, 0
      %p138 = por %p136, %p137
      %s139 = ssub.s32 %s26, %s33
      %p140 = scmp.eq.s32.totalorder %s139, 0
      %s142 = sadd.s32 %s141, 1
      %s143 = scalar_select %p140, %s141, %s142
      %p146 = pneg %p140
      %p147 = scmp.eq.s32.totalorder %s26, 1
      %p148 = por %p146, %p147
      %p149 = scmp.ne.s32.totalorder %s141, %s144
      %p150 = scmp.eq.s32.totalorder %s26, 0
      %p151 = por %p149, %p150
      %p152 = scmp.ne.s32.totalorder %s141, %s144
      %p153 = scmp.eq.s32.totalorder %s31, 1
      %p154 = por %p152, %p153
      %p155 = scmp.ne.s32.totalorder %s144, %s145
      %p156 = scmp.eq.s32.totalorder %s31, 0
      %p157 = por %p155, %p156
      %p158 = scmp.ne.s32.totalorder %s144, %s145
      %p159 = scmp.eq.s32.totalorder %s32, 1
      %p160 = por %p158, %p159
      %p162 = scmp.ne.s32.totalorder %s145, %s161
      %p163 = scmp.eq.s32.totalorder %s32, 0
      %p164 = por %p162, %p163
      %p165 = scmp.le.s32.totalorder 1, %s26
      %p166 = scmp.lt.s32.totalorder %s26, 3
      %p167 = pnand %p165, %p166
      %p168 = pneg %p167
      // Predicated region
      $region9: #{tpu_custom_call.1} parent=5 // pred_check
        _
      $region10: #{tpu_custom_call.1} parent=5 // pred_check_branch
        %170 = sbr.rel (%p167) target = $region12
      $region11: #{tpu_custom_call.1} parent=5 // pred_region
        %s171 = ssub.s32 %s26, 1
        // Predicated region
        $region13: #{tpu_custom_call.1} parent=11 // pred_check
          %p172 = pneg %p131
        $region14: #{tpu_custom_call.1} parent=11 // pred_check_branch
          %174 = sbr.rel (%p172) target = $region16
        $region15: #{tpu_custom_call.1} parent=11 // pred_region
          _
        $region16: #{tpu_custom_call.1} parent=11 // pred_fallthru
          _
      $region12: #{tpu_custom_call.1} parent=5 // pred_fallthru
        _
      %p175 = scmp.lt.s32.totalorder %s26, 2
      // Predicated region
      $region17: #{tpu_custom_call.1} parent=5 // pred_check
        %p176 = pneg %p175
      $region18: #{tpu_custom_call.1} parent=5 // pred_check_branch
        %178 = sbr.rel (%p176) target = $region20
      $region19: #{tpu_custom_call.1} parent=5 // pred_region
        // Predicated region
        $region21: #{tpu_custom_call.1} parent=19 // pred_check
          %p179 = pneg %p46
        $region22: #{tpu_custom_call.1} parent=19 // pred_check_branch
          %181 = sbr.rel (%p179) target = $region24
        $region23: #{tpu_custom_call.1} parent=19 // pred_region
          %s182 = smul.u32 2, %s26
          %p183 = scmp.lt.s32.totalorder %s182, 3
          %s184 = scalar_select %p183, %s182, 3
          %s185 = scalar_lea.vmem %s1, %s184
          %s186 = smul.u32 2, %s26
        $region24: #{tpu_custom_call.1} parent=19 // pred_fallthru
          _
        // Predicated region
        $region25: #{tpu_custom_call.1} parent=19 // pred_check
          %p187 = pneg %p74
        $region26: #{tpu_custom_call.1} parent=19 // pred_check_branch
          %189 = sbr.rel (%p187) target = $region28
        $region27: #{tpu_custom_call.1} parent=19 // pred_region
          %s190 = sand.u32 %s64, 1
          %s191 = scalar_lea.sflag [#allocation5], %s190
          %s192 = sand.u32 %s64, 1
          %s193 = smul.addr %s192, 32
          %s194 = scalar_lea.vmem [#allocation4], %s193
          %s195 = sld [smem:[#allocation3 + %s26]]
          %s196 = smul.u32 2, %s195
          %s198 = ssub.s32 512, 512
          %199 = vsyncadd %s191, %s198
          %s200 = smul.addr %s196, 64
          %s201 = scalar_lea.hbm %s2, %s200
          %s202 = sshll.u32 %s194, 4
          %s203 = int_to_ptr.vmem [resolvable:$true] %s202
          %208 = dma.hbm_to_vmem [thread:$0]  %s201, 512, %s203, %s191, 384, 128, 8
        $region28: #{tpu_custom_call.1} parent=19 // pred_fallthru
          _
        // Predicated region
        $region29: #{tpu_custom_call.1} parent=19 // pred_check
          %p209 = pneg %p104
        $region30: #{tpu_custom_call.1} parent=19 // pred_check_branch
          %211 = sbr.rel (%p209) target = $region32
        $region31: #{tpu_custom_call.1} parent=19 // pred_region
          %s212 = sand.u32 %s94, 1
          %s213 = scalar_lea.sflag [#allocation8], %s212
          %s214 = sand.u32 %s94, 1
          %s215 = smul.addr %s214, 32
          %s216 = scalar_lea.vmem [#allocation7], %s215
          %s217 = sld [smem:[#allocation3 + %s26]]
          %s218 = sadd.s32 %s217, 1
          %s219 = smul.u32 2, %s218
          %s221 = ssub.s32 512, 512
          %222 = vsyncadd %s213, %s221
          %s223 = smul.addr %s219, 64
          %s224 = scalar_lea.hbm %s3, %s223
          %s225 = sshll.u32 %s216, 4
          %s226 = int_to_ptr.vmem [resolvable:$true] %s225
          %231 = dma.hbm_to_vmem [thread:$0]  %s224, 512, %s226, %s213, 384, 128, 8
        $region32: #{tpu_custom_call.1} parent=19 // pred_fallthru
          _
      $region20: #{tpu_custom_call.1} parent=5 // pred_fallthru
        _
      %p232 = scmp.le.s32.totalorder 1, %s26
      %p233 = scmp.lt.s32.totalorder %s26, 3
      %p234 = pnand %p232, %p233
      %p235 = pneg %p234
      // Predicated region
      $region33: #{tpu_custom_call.1} parent=5 // pred_check
        _
      $region34: #{tpu_custom_call.1} parent=5 // pred_check_branch
        %237 = sbr.rel (%p234) target = $region36
      $region35: #{tpu_custom_call.1} parent=5 // pred_region
        %s238 = ssub.s32 %s26, 1
        %s239 = sand.u32 %s67, 1
        %s240 = scalar_lea.sflag [#allocation5], %s239
        %s241 = sand.u32 %s67, 1
        %s242 = smul.addr %s241, 32
        %s243 = scalar_lea.vmem [#allocation4], %s242
        // Predicated region
        $region37: #{tpu_custom_call.1} parent=35 // pred_check
          %p244 = pneg %p80
        $region38: #{tpu_custom_call.1} parent=35 // pred_check_branch
          %246 = sbr.rel (%p244) target = $region40
        $region39: #{tpu_custom_call.1} parent=35 // pred_region
          %247 = dma.done %s240, 512
        $region40: #{tpu_custom_call.1} parent=35 // pred_fallthru
          _
        %s248 = sand.u32 %s97, 1
        %s249 = scalar_lea.sflag [#allocation8], %s248
        %s250 = sand.u32 %s97, 1
        %s251 = smul.addr %s250, 32
        %s252 = scalar_lea.vmem [#allocation7], %s251
        // Predicated region
        $region41: #{tpu_custom_call.1} parent=35 // pred_check
          %p253 = pneg %p110
        $region42: #{tpu_custom_call.1} parent=35 // pred_check_branch
          %255 = sbr.rel (%p253) target = $region44
        $region43: #{tpu_custom_call.1} parent=35 // pred_region
          %256 = dma.done %s249, 512
        $region44: #{tpu_custom_call.1} parent=35 // pred_fallthru
          _
        %s257 = smul.u32 2, %s31
        %p258 = scmp.lt.s32.totalorder %s257, 3
        %s259 = scalar_select %p258, %s257, 3
        %s260 = scalar_lea.vmem %s1, %s259
        %p261 = pneg %p52
        %p262 = pneg %p49
        %s263 = sand.u32 %s67, 1
        %s264 = scalar_lea.sflag [#allocation5], %s263
        %s265 = sand.u32 %s67, 1
        %s266 = smul.addr %s265, 32
        %s267 = scalar_lea.vmem [#allocation4], %s266
        %p268 = pneg %p80
        %p269 = pneg %p77
        %s270 = sand.u32 %s97, 1
        %s271 = scalar_lea.sflag [#allocation8], %s270
        %s272 = sand.u32 %s97, 1
        %s273 = smul.addr %s272, 32
        %s274 = scalar_lea.vmem [#allocation7], %s273
        %p275 = pneg %p110
        %p276 = pneg %p107
        %p277 = pneg %p131
        %p278 = pneg %p128
        %p279 = pneg %p157
        %p280 = pneg %p154
        %s281 = sand.u32 %s144, 1
        %s282 = scalar_lea.sflag [#allocation6], %s281
        %s283 = sand.u32 %s144, 1
        %s284 = smul.addr %s283, 32
        %s285 = scalar_lea.vmem [#allocation9], %s284
        %s286 = smul.u32 2, %s31
        %p287 = scmp.lt.s32.totalorder %s286, 3
        %s288 = scalar_select %p287, %s286, 3
        %s289 = scalar_lea.vmem %s1, %s288
        %s290 = smul.u32 2, %s31
        %s291 = sld [smem:[#allocation3 + %s31]]
        %s292 = smul.u32 2, %s291
        %s293 = sld [smem:[#allocation3 + %s31]]
        %s294 = sadd.s32 %s293, 1
        %s295 = smul.u32 2, %s294
        %s296 = smul.u32 2, %s31
        %s297 = sshra.s32 %s31, 7
        %s298 = sand.u32 %s31, 127
        %s299 = sadd.s32 %s297, 1
        %s300 = smul.u32 %s299, 128
        %s301 = sshra.s32 %s31, 7
        %s302 = sand.u32 %s31, 127
        %s303 = sadd.s32 %s300, %s302
        %s304 = sld [smem:[#allocation3 + %s303]]
        %v305 = vld [vmem:[%s4] sm:$0xf]
        %v306 = vld [vmem:[%s4 + $0x4] sm:$0xf]
        %v307 = vld [vmem:[%s4 + $0x8] sm:$0xf]
        %v308 = vld [vmem:[%s4 + $0xc] sm:$0xf]
        %v309 = vunpack.c.l.bf16 %v305
        %v310 = vunpack.c.l.bf16 %v306
        %v311 = vunpack.c.l.bf16 %v307
        %v312 = vunpack.c.l.bf16 %v308
        %p313 = scmp.eq.s32.totalorder %s304, 0
        // Predicated region
        $region45: #{tpu_custom_call.1} parent=35 // pred_check
          %p314 = pneg %p313
        $region46: #{tpu_custom_call.1} parent=35 // pred_check_branch
          %316 = sbr.rel (%p314) target = $region48
        $region47: #{tpu_custom_call.1} parent=35 // pred_region
          %318 = vset.pattern.permute.xlu0 0
          %319 = vperm.xlu0 %318, %v309
          %v320 = vpop.permute.xlu0 %319
          %323 = vset.pattern.permute.xlu0 0
          %324 = vperm.xlu0 %323, %v310
          %v325 = vpop.permute.xlu0 %324
          %328 = vset.pattern.permute.xlu0 0
          %329 = vperm.xlu0 %328, %v311
          %v330 = vpop.permute.xlu0 %329
          %333 = vset.pattern.permute.xlu0 0
          %334 = vperm.xlu0 %333, %v312
          %v335 = vpop.permute.xlu0 %334
          %v337 = vpack.c.bf16 %v325, %v320
          %v338 = vpack.c.bf16 %v335, %v330
          %v342 = vunpack.c.l.s4 839922192
          %v343 = vunpack.c.0.s8 %v342
          %v344 = vlaneseq
          %v345 = vshrl.u32 %v344, 7
          %v346 = vsub.s32 %v343, %v345
          %v347 = vrot.slane %v337, %v346
          %v349 = vunpack.c.l.s4 1985246804
          %v350 = vunpack.c.0.s8 %v349
          %v351 = vlaneseq
          %v352 = vshrl.u32 %v351, 7
          %v353 = vsub.s32 %v350, %v352
          %v354 = vrot.slane %v337, %v353
          %v356 = vunpack.c.l.s4 839922192
          %v357 = vunpack.c.0.s8 %v356
          %v358 = vlaneseq
          %v359 = vshrl.u32 %v358, 7
          %v360 = vsub.s32 %v357, %v359
          %v361 = vrot.slane %v338, %v360
          %v363 = vunpack.c.l.s4 1985246804
          %v364 = vunpack.c.0.s8 %v363
          %v365 = vlaneseq
          %v366 = vshrl.u32 %v365, 7
          %v367 = vsub.s32 %v364, %v366
          %v368 = vrot.slane %v338, %v367
          %373 = vst [vmem:[%s285] sm:$0xff] %v347
          %374 = vst [vmem:[%s285 + $0x8] sm:$0xff] %v354
          %375 = vst [vmem:[%s285 + $0x10] sm:$0xff] %v361
          %376 = vst [vmem:[%s285 + $0x18] sm:$0xff] %v368
        $region48: #{tpu_custom_call.1} parent=35 // pred_fallthru
          _
        %p377 = scmp.gt.s32.totalorder %s304, 0
        // Predicated region
        $region49: #{tpu_custom_call.1} parent=35 // pred_check
          %p378 = pneg %p377
        $region50: #{tpu_custom_call.1} parent=35 // pred_check_branch
          %380 = sbr.rel (%p378) target = $region52
        $region51: #{tpu_custom_call.1} parent=35 // pred_region
          %v381 = vld [vmem:[%s289] sm:$0x3]
          %v382 = vlaneseq
          %v383 = vshrl.u32 %v382, 7
          %v384 = vadd.s32 %v383, 8
          %v385 = vadd.s32 %v383, 16
          %v386 = vadd.s32 %v383, 24
          %v387 = vadd.s32 %v383, 32
          %v388 = vadd.s32 %v383, 40
          %v389 = vadd.s32 %v383, 48
          %v390 = vadd.s32 %v383, 56
          %v391 = vadd.s32 %v383, 64
          %v392 = vadd.s32 %v383, 72
          %v393 = vadd.s32 %v383, 80
          %v394 = vadd.s32 %v383, 88
          %v395 = vadd.s32 %v383, 96
          %v396 = vadd.s32 %v383, 104
          %v397 = vadd.s32 %v383, 112
          %v398 = vadd.s32 %v383, 120
          %v399 = vadd.s32 %v383, 128
          %v400 = vadd.s32 %v383, 136
          %v401 = vadd.s32 %v383, 144
          %v402 = vadd.s32 %v383, 152
          %v403 = vadd.s32 %v383, 160
          %v404 = vadd.s32 %v383, 168
          %v405 = vadd.s32 %v383, 176
          %v406 = vadd.s32 %v383, 184
          %v407 = vadd.s32 %v383, 192
          %v408 = vadd.s32 %v383, 200
          %v409 = vadd.s32 %v383, 208
          %v410 = vadd.s32 %v383, 216
          %v411 = vadd.s32 %v383, 224
          %v412 = vadd.s32 %v383, 232
          %v413 = vadd.s32 %v383, 240
          %v414 = vadd.s32 %v383, 248
          %v415 = vlaneseq
          %v416 = vshrl.u32 %v415, 7
          %v417 = vsub.s32 0, %v416
          %v418 = vrot.slane %v381, %v417
          %v419 = vlaneseq
          %v420 = vshrl.u32 %v419, 7
          %v421 = vsub.s32 1, %v420
          %v422 = vrot.slane %v381, %v421
          %vm423 = vcmp.eq.s32.totalorder %v383, %v418
          %vm424 = vcmp.eq.s32.totalorder %v383, %v422
          %vm425 = vcmp.eq.s32.totalorder %v384, %v418
          %vm426 = vcmp.eq.s32.totalorder %v384, %v422
          %vm427 = vcmp.eq.s32.totalorder %v385, %v418
          %vm428 = vcmp.eq.s32.totalorder %v385, %v422
          %vm429 = vcmp.eq.s32.totalorder %v386, %v418
          %vm430 = vcmp.eq.s32.totalorder %v386, %v422
          %vm431 = vcmp.eq.s32.totalorder %v387, %v418
          %vm432 = vcmp.eq.s32.totalorder %v387, %v422
          %vm433 = vcmp.eq.s32.totalorder %v388, %v418
          %vm434 = vcmp.eq.s32.totalorder %v388, %v422
          %vm435 = vcmp.eq.s32.totalorder %v389, %v418
          %vm436 = vcmp.eq.s32.totalorder %v389, %v422
          %vm437 = vcmp.eq.s32.totalorder %v390, %v418
          %vm438 = vcmp.eq.s32.totalorder %v390, %v422
          %vm439 = vcmp.eq.s32.totalorder %v391, %v418
          %vm440 = vcmp.eq.s32.totalorder %v391, %v422
          %vm441 = vcmp.eq.s32.totalorder %v392, %v418
          %vm442 = vcmp.eq.s32.totalorder %v392, %v422
          %vm443 = vcmp.eq.s32.totalorder %v393, %v418
          %vm444 = vcmp.eq.s32.totalorder %v393, %v422
          %vm445 = vcmp.eq.s32.totalorder %v394, %v418
          %vm446 = vcmp.eq.s32.totalorder %v394, %v422
          %vm447 = vcmp.eq.s32.totalorder %v395, %v418
          %vm448 = vcmp.eq.s32.totalorder %v395, %v422
          %vm449 = vcmp.eq.s32.totalorder %v396, %v418
          %vm450 = vcmp.eq.s32.totalorder %v396, %v422
          %vm451 = vcmp.eq.s32.totalorder %v397, %v418
          %vm452 = vcmp.eq.s32.totalorder %v397, %v422
          %vm453 = vcmp.eq.s32.totalorder %v398, %v418
          %vm454 = vcmp.eq.s32.totalorder %v398, %v422
          %vm455 = vcmp.eq.s32.totalorder %v399, %v418
          %vm456 = vcmp.eq.s32.totalorder %v399, %v422
          %vm457 = vcmp.eq.s32.totalorder %v400, %v418
          %vm458 = vcmp.eq.s32.totalorder %v400, %v422
          %vm459 = vcmp.eq.s32.totalorder %v401, %v418
          %vm460 = vcmp.eq.s32.totalorder %v401, %v422
          %vm461 = vcmp.eq.s32.totalorder %v402, %v418
          %vm462 = vcmp.eq.s32.totalorder %v402, %v422
          %vm463 = vcmp.eq.s32.totalorder %v403, %v418
          %vm464 = vcmp.eq.s32.totalorder %v403, %v422
          %vm465 = vcmp.eq.s32.totalorder %v404, %v418
          %vm466 = vcmp.eq.s32.totalorder %v404, %v422
          %vm467 = vcmp.eq.s32.totalorder %v405, %v418
          %vm468 = vcmp.eq.s32.totalorder %v405, %v422
          %vm469 = vcmp.eq.s32.totalorder %v406, %v418
          %vm470 = vcmp.eq.s32.totalorder %v406, %v422
          %vm471 = vcmp.eq.s32.totalorder %v407, %v418
          %vm472 = vcmp.eq.s32.totalorder %v407, %v422
          %vm473 = vcmp.eq.s32.totalorder %v408, %v418
          %vm474 = vcmp.eq.s32.totalorder %v408, %v422
          %vm475 = vcmp.eq.s32.totalorder %v409, %v418
          %vm476 = vcmp.eq.s32.totalorder %v409, %v422
          %vm477 = vcmp.eq.s32.totalorder %v410, %v418
          %vm478 = vcmp.eq.s32.totalorder %v410, %v422
          %vm479 = vcmp.eq.s32.totalorder %v411, %v418
          %vm480 = vcmp.eq.s32.totalorder %v411, %v422
          %vm481 = vcmp.eq.s32.totalorder %v412, %v418
          %vm482 = vcmp.eq.s32.totalorder %v412, %v422
          %vm483 = vcmp.eq.s32.totalorder %v413, %v418
          %vm484 = vcmp.eq.s32.totalorder %v413, %v422
          %vm485 = vcmp.eq.s32.totalorder %v414, %v418
          %vm486 = vcmp.eq.s32.totalorder %v414, %v422
          %v487 = vsel %vm423, 1, 0
          %v488 = vsel %vm424, 1, 0
          %v489 = vsel %vm425, 1, 0
          %v490 = vsel %vm426, 1, 0
          %v491 = vsel %vm427, 1, 0
          %v492 = vsel %vm428, 1, 0
          %v493 = vsel %vm429, 1, 0
          %v494 = vsel %vm430, 1, 0
          %v495 = vsel %vm431, 1, 0
          %v496 = vsel %vm432, 1, 0
          %v497 = vsel %vm433, 1, 0
          %v498 = vsel %vm434, 1, 0
          %v499 = vsel %vm435, 1, 0
          %v500 = vsel %vm436, 1, 0
          %v501 = vsel %vm437, 1, 0
          %v502 = vsel %vm438, 1, 0
          %v503 = vsel %vm439, 1, 0
          %v504 = vsel %vm440, 1, 0
          %v505 = vsel %vm441, 1, 0
          %v506 = vsel %vm442, 1, 0
          %v507 = vsel %vm443, 1, 0
          %v508 = vsel %vm444, 1, 0
          %v509 = vsel %vm445, 1, 0
          %v510 = vsel %vm446, 1, 0
          %v511 = vsel %vm447, 1, 0
          %v512 = vsel %vm448, 1, 0
          %v513 = vsel %vm449, 1, 0
          %v514 = vsel %vm450, 1, 0
          %v515 = vsel %vm451, 1, 0
          %v516 = vsel %vm452, 1, 0
          %v517 = vsel %vm453, 1, 0
          %v518 = vsel %vm454, 1, 0
          %v519 = vsel %vm455, 1, 0
          %v520 = vsel %vm456, 1, 0
          %v521 = vsel %vm457, 1, 0
          %v522 = vsel %vm458, 1, 0
          %v523 = vsel %vm459, 1, 0
          %v524 = vsel %vm460, 1, 0
          %v525 = vsel %vm461, 1, 0
          %v526 = vsel %vm462, 1, 0
          %v527 = vsel %vm463, 1, 0
          %v528 = vsel %vm464, 1, 0
          %v529 = vsel %vm465, 1, 0
          %v530 = vsel %vm466, 1, 0
          %v531 = vsel %vm467, 1, 0
          %v532 = vsel %vm468, 1, 0
          %v533 = vsel %vm469, 1, 0
          %v534 = vsel %vm470, 1, 0
          %v535 = vsel %vm471, 1, 0
          %v536 = vsel %vm472, 1, 0
          %v537 = vsel %vm473, 1, 0
          %v538 = vsel %vm474, 1, 0
          %v539 = vsel %vm475, 1, 0
          %v540 = vsel %vm476, 1, 0
          %v541 = vsel %vm477, 1, 0
          %v542 = vsel %vm478, 1, 0
          %v543 = vsel %vm479, 1, 0
          %v544 = vsel %vm480, 1, 0
          %v545 = vsel %vm481, 1, 0
          %v546 = vsel %vm482, 1, 0
          %v547 = vsel %vm483, 1, 0
          %v548 = vsel %vm484, 1, 0
          %v549 = vsel %vm485, 1, 0
          %v550 = vsel %vm486, 1, 0
          %v551 = vcvt.s32.f32 %v487
          %v552 = vcvt.s32.f32 %v488
          %v553 = vcvt.s32.f32 %v489
          %v554 = vcvt.s32.f32 %v490
          %v555 = vcvt.s32.f32 %v491
          %v556 = vcvt.s32.f32 %v492
          %v557 = vcvt.s32.f32 %v493
          %v558 = vcvt.s32.f32 %v494
          %v559 = vcvt.s32.f32 %v495
          %v560 = vcvt.s32.f32 %v496
          %v561 = vcvt.s32.f32 %v497
          %v562 = vcvt.s32.f32 %v498
          %v563 = vcvt.s32.f32 %v499
          %v564 = vcvt.s32.f32 %v500
          %v565 = vcvt.s32.f32 %v501
          %v566 = vcvt.s32.f32 %v502
          %v567 = vcvt.s32.f32 %v503
          %v568 = vcvt.s32.f32 %v504
          %v569 = vcvt.s32.f32 %v505
          %v570 = vcvt.s32.f32 %v506
          %v571 = vcvt.s32.f32 %v507
          %v572 = vcvt.s32.f32 %v508
          %v573 = vcvt.s32.f32 %v509
          %v574 = vcvt.s32.f32 %v510
          %v575 = vcvt.s32.f32 %v511
          %v576 = vcvt.s32.f32 %v512
          %v577 = vcvt.s32.f32 %v513
          %v578 = vcvt.s32.f32 %v514
          %v579 = vcvt.s32.f32 %v515
          %v580 = vcvt.s32.f32 %v516
          %v581 = vcvt.s32.f32 %v517
          %v582 = vcvt.s32.f32 %v518
          %v583 = vcvt.s32.f32 %v519
          %v584 = vcvt.s32.f32 %v520
          %v585 = vcvt.s32.f32 %v521
          %v586 = vcvt.s32.f32 %v522
          %v587 = vcvt.s32.f32 %v523
          %v588 = vcvt.s32.f32 %v524
          %v589 = vcvt.s32.f32 %v525
          %v590 = vcvt.s32.f32 %v526
          %v591 = vcvt.s32.f32 %v527
          %v592 = vcvt.s32.f32 %v528
          %v593 = vcvt.s32.f32 %v529
          %v594 = vcvt.s32.f32 %v530
          %v595 = vcvt.s32.f32 %v531
          %v596 = vcvt.s32.f32 %v532
          %v597 = vcvt.s32.f32 %v533
          %v598 = vcvt.s32.f32 %v534
          %v599 = vcvt.s32.f32 %v535
          %v600 = vcvt.s32.f32 %v536
          %v601 = vcvt.s32.f32 %v537
          %v602 = vcvt.s32.f32 %v538
          %v603 = vcvt.s32.f32 %v539
          %v604 = vcvt.s32.f32 %v540
          %v605 = vcvt.s32.f32 %v541
          %v606 = vcvt.s32.f32 %v542
          %v607 = vcvt.s32.f32 %v543
          %v608 = vcvt.s32.f32 %v544
          %v609 = vcvt.s32.f32 %v545
          %v610 = vcvt.s32.f32 %v546
          %v611 = vcvt.s32.f32 %v547
          %v612 = vcvt.s32.f32 %v548
          %v613 = vcvt.s32.f32 %v549
          %v614 = vcvt.s32.f32 %v550
          %v615 = vpack.c.bf16 %v553, %v551
          %v616 = vpack.c.bf16 %v554, %v552
          %v617 = vpack.c.bf16 %v557, %v555
          %v618 = vpack.c.bf16 %v558, %v556
          %v619 = vpack.c.bf16 %v561, %v559
          %v620 = vpack.c.bf16 %v562, %v560
          %v621 = vpack.c.bf16 %v565, %v563
          %v622 = vpack.c.bf16 %v566, %v564
          %v623 = vpack.c.bf16 %v569, %v567
          %v624 = vpack.c.bf16 %v570, %v568
          %v625 = vpack.c.bf16 %v573, %v571
          %v626 = vpack.c.bf16 %v574, %v572
          %v627 = vpack.c.bf16 %v577, %v575
          %v628 = vpack.c.bf16 %v578, %v576
          %v629 = vpack.c.bf16 %v581, %v579
          %v630 = vpack.c.bf16 %v582, %v580
          %v631 = vpack.c.bf16 %v585, %v583
          %v632 = vpack.c.bf16 %v586, %v584
          %v633 = vpack.c.bf16 %v589, %v587
          %v634 = vpack.c.bf16 %v590, %v588
          %v635 = vpack.c.bf16 %v593, %v591
          %v636 = vpack.c.bf16 %v594, %v592
          %v637 = vpack.c.bf16 %v597, %v595
          %v638 = vpack.c.bf16 %v598, %v596
          %v639 = vpack.c.bf16 %v601, %v599
          %v640 = vpack.c.bf16 %v602, %v600
          %v641 = vpack.c.bf16 %v605, %v603
          %v642 = vpack.c.bf16 %v606, %v604
          %v643 = vpack.c.bf16 %v609, %v607
          %v644 = vpack.c.bf16 %v610, %v608
          %v645 = vpack.c.bf16 %v613, %v611
          %v646 = vpack.c.bf16 %v614, %v612
          %v647 = vadd.s32 %v383, 256
          %v648 = vadd.s32 %v384, 256
          %v649 = vadd.s32 %v385, 256
          %v650 = vadd.s32 %v386, 256
          %v651 = vadd.s32 %v387, 256
          %v652 = vadd.s32 %v388, 256
          %v653 = vadd.s32 %v389, 256
          %v654 = vadd.s32 %v390, 256
          %v655 = vadd.s32 %v391, 256
          %v656 = vadd.s32 %v392, 256
          %v657 = vadd.s32 %v393, 256
          %v658 = vadd.s32 %v394, 256
          %v659 = vadd.s32 %v395, 256
          %v660 = vadd.s32 %v396, 256
          %v661 = vadd.s32 %v397, 256
          %v662 = vadd.s32 %v398, 256
          %v663 = vadd.s32 %v399, 256
          %v664 = vadd.s32 %v400, 256
          %v665 = vadd.s32 %v401, 256
          %v666 = vadd.s32 %v402, 256
          %v667 = vadd.s32 %v403, 256
          %v668 = vadd.s32 %v404, 256
          %v669 = vadd.s32 %v405, 256
          %v670 = vadd.s32 %v406, 256
          %v671 = vadd.s32 %v407, 256
          %v672 = vadd.s32 %v408, 256
          %v673 = vadd.s32 %v409, 256
          %v674 = vadd.s32 %v410, 256
          %v675 = vadd.s32 %v411, 256
          %v676 = vadd.s32 %v412, 256
          %v677 = vadd.s32 %v413, 256
          %v678 = vadd.s32 %v414, 256
          %vm679 = vcmp.eq.s32.totalorder %v647, %v418
          %vm680 = vcmp.eq.s32.totalorder %v647, %v422
          %vm681 = vcmp.eq.s32.totalorder %v648, %v418
          %vm682 = vcmp.eq.s32.totalorder %v648, %v422
          %vm683 = vcmp.eq.s32.totalorder %v649, %v418
          %vm684 = vcmp.eq.s32.totalorder %v649, %v422
          %vm685 = vcmp.eq.s32.totalorder %v650, %v418
          %vm686 = vcmp.eq.s32.totalorder %v650, %v422
          %vm687 = vcmp.eq.s32.totalorder %v651, %v418
          %vm688 = vcmp.eq.s32.totalorder %v651, %v422
          %vm689 = vcmp.eq.s32.totalorder %v652, %v418
          %vm690 = vcmp.eq.s32.totalorder %v652, %v422
          %vm691 = vcmp.eq.s32.totalorder %v653, %v418
          %vm692 = vcmp.eq.s32.totalorder %v653, %v422
          %vm693 = vcmp.eq.s32.totalorder %v654, %v418
          %vm694 = vcmp.eq.s32.totalorder %v654, %v422
          %vm695 = vcmp.eq.s32.totalorder %v655, %v418
          %vm696 = vcmp.eq.s32.totalorder %v655, %v422
          %vm697 = vcmp.eq.s32.totalorder %v656, %v418
          %vm698 = vcmp.eq.s32.totalorder %v656, %v422
          %vm699 = vcmp.eq.s32.totalorder %v657, %v418
          %vm700 = vcmp.eq.s32.totalorder %v657, %v422
          %vm701 = vcmp.eq.s32.totalorder %v658, %v418
          %vm702 = vcmp.eq.s32.totalorder %v658, %v422
          %vm703 = vcmp.eq.s32.totalorder %v659, %v418
          %vm704 = vcmp.eq.s32.totalorder %v659, %v422
          %vm705 = vcmp.eq.s32.totalorder %v660, %v418
          %vm706 = vcmp.eq.s32.totalorder %v660, %v422
          %vm707 = vcmp.eq.s32.totalorder %v661, %v418
          %vm708 = vcmp.eq.s32.totalorder %v661, %v422
          %vm709 = vcmp.eq.s32.totalorder %v662, %v418
          %vm710 = vcmp.eq.s32.totalorder %v662, %v422
          %vm711 = vcmp.eq.s32.totalorder %v663, %v418
          %vm712 = vcmp.eq.s32.totalorder %v663, %v422
          %vm713 = vcmp.eq.s32.totalorder %v664, %v418
          %vm714 = vcmp.eq.s32.totalorder %v664, %v422
          %vm715 = vcmp.eq.s32.totalorder %v665, %v418
          %vm716 = vcmp.eq.s32.totalorder %v665, %v422
          %vm717 = vcmp.eq.s32.totalorder %v666, %v418
          %vm718 = vcmp.eq.s32.totalorder %v666, %v422
          %vm719 = vcmp.eq.s32.totalorder %v667, %v418
          %vm720 = vcmp.eq.s32.totalorder %v667, %v422
          %vm721 = vcmp.eq.s32.totalorder %v668, %v418
          %vm722 = vcmp.eq.s32.totalorder %v668, %v422
          %vm723 = vcmp.eq.s32.totalorder %v669, %v418
          %vm724 = vcmp.eq.s32.totalorder %v669, %v422
          %vm725 = vcmp.eq.s32.totalorder %v670, %v418
          %vm726 = vcmp.eq.s32.totalorder %v670, %v422
          %vm727 = vcmp.eq.s32.totalorder %v671, %v418
          %vm728 = vcmp.eq.s32.totalorder %v671, %v422
          %vm729 = vcmp.eq.s32.totalorder %v672, %v418
          %vm730 = vcmp.eq.s32.totalorder %v672, %v422
          %vm731 = vcmp.eq.s32.totalorder %v673, %v418
          %vm732 = vcmp.eq.s32.totalorder %v673, %v422
          %vm733 = vcmp.eq.s32.totalorder %v674, %v418
          %vm734 = vcmp.eq.s32.totalorder %v674, %v422
          %vm735 = vcmp.eq.s32.totalorder %v675, %v418
          %vm736 = vcmp.eq.s32.totalorder %v675, %v422
          %vm737 = vcmp.eq.s32.totalorder %v676, %v418
          %vm738 = vcmp.eq.s32.totalorder %v676, %v422
          %vm739 = vcmp.eq.s32.totalorder %v677, %v418
          %vm740 = vcmp.eq.s32.totalorder %v677, %v422
          %vm741 = vcmp.eq.s32.totalorder %v678, %v418
          %vm742 = vcmp.eq.s32.totalorder %v678, %v422
          %v743 = vsel %vm679, 1, 0
          %v744 = vsel %vm680, 1, 0
          %v745 = vsel %vm681, 1, 0
          %v746 = vsel %vm682, 1, 0
          %v747 = vsel %vm683, 1, 0
          %v748 = vsel %vm684, 1, 0
          %v749 = vsel %vm685, 1, 0
          %v750 = vsel %vm686, 1, 0
          %v751 = vsel %vm687, 1, 0
          %v752 = vsel %vm688, 1, 0
          %v753 = vsel %vm689, 1, 0
          %v754 = vsel %vm690, 1, 0
          %v755 = vsel %vm691, 1, 0
          %v756 = vsel %vm692, 1, 0
          %v757 = vsel %vm693, 1, 0
          %v758 = vsel %vm694, 1, 0
          %v759 = vsel %vm695, 1, 0
          %v760 = vsel %vm696, 1, 0
          %v761 = vsel %vm697, 1, 0
          %v762 = vsel %vm698, 1, 0
          %v763 = vsel %vm699, 1, 0
          %v764 = vsel %vm700, 1, 0
          %v765 = vsel %vm701, 1, 0
          %v766 = vsel %vm702, 1, 0
          %v767 = vsel %vm703, 1, 0
          %v768 = vsel %vm704, 1, 0
          %v769 = vsel %vm705, 1, 0
          %v770 = vsel %vm706, 1, 0
          %v771 = vsel %vm707, 1, 0
          %v772 = vsel %vm708, 1, 0
          %v773 = vsel %vm709, 1, 0
          %v774 = vsel %vm710, 1, 0
          %v775 = vsel %vm711, 1, 0
          %v776 = vsel %vm712, 1, 0
          %v777 = vsel %vm713, 1, 0
          %v778 = vsel %vm714, 1, 0
          %v779 = vsel %vm715, 1, 0
          %v780 = vsel %vm716, 1, 0
          %v781 = vsel %vm717, 1, 0
          %v782 = vsel %vm718, 1, 0
          %v783 = vsel %vm719, 1, 0
          %v784 = vsel %vm720, 1, 0
          %v785 = vsel %vm721, 1, 0
          %v786 = vsel %vm722, 1, 0
          %v787 = vsel %vm723, 1, 0
          %v788 = vsel %vm724, 1, 0
          %v789 = vsel %vm725, 1, 0
          %v790 = vsel %vm726, 1, 0
          %v791 = vsel %vm727, 1, 0
          %v792 = vsel %vm728, 1, 0
          %v793 = vsel %vm729, 1, 0
          %v794 = vsel %vm730, 1, 0
          %v795 = vsel %vm731, 1, 0
          %v796 = vsel %vm732, 1, 0
          %v797 = vsel %vm733, 1, 0
          %v798 = vsel %vm734, 1, 0
          %v799 = vsel %vm735, 1, 0
          %v800 = vsel %vm736, 1, 0
          %v801 = vsel %vm737, 1, 0
          %v802 = vsel %vm738, 1, 0
          %v803 = vsel %vm739, 1, 0
          %v804 = vsel %vm740, 1, 0
          %v805 = vsel %vm741, 1, 0
          %v806 = vsel %vm742, 1, 0
          %v807 = vcvt.s32.f32 %v743
          %v808 = vcvt.s32.f32 %v744
          %v809 = vcvt.s32.f32 %v745
          %v810 = vcvt.s32.f32 %v746
          %v811 = vcvt.s32.f32 %v747
          %v812 = vcvt.s32.f32 %v748
          %v813 = vcvt.s32.f32 %v749
          %v814 = vcvt.s32.f32 %v750
          %v815 = vcvt.s32.f32 %v751
          %v816 = vcvt.s32.f32 %v752
          %v817 = vcvt.s32.f32 %v753
          %v818 = vcvt.s32.f32 %v754
          %v819 = vcvt.s32.f32 %v755
          %v820 = vcvt.s32.f32 %v756
          %v821 = vcvt.s32.f32 %v757
          %v822 = vcvt.s32.f32 %v758
          %v823 = vcvt.s32.f32 %v759
          %v824 = vcvt.s32.f32 %v760
          %v825 = vcvt.s32.f32 %v761
          %v826 = vcvt.s32.f32 %v762
          %v827 = vcvt.s32.f32 %v763
          %v828 = vcvt.s32.f32 %v764
          %v829 = vcvt.s32.f32 %v765
          %v830 = vcvt.s32.f32 %v766
          %v831 = vcvt.s32.f32 %v767
          %v832 = vcvt.s32.f32 %v768
          %v833 = vcvt.s32.f32 %v769
          %v834 = vcvt.s32.f32 %v770
          %v835 = vcvt.s32.f32 %v771
          %v836 = vcvt.s32.f32 %v772
          %v837 = vcvt.s32.f32 %v773
          %v838 = vcvt.s32.f32 %v774
          %v839 = vcvt.s32.f32 %v775
          %v840 = vcvt.s32.f32 %v776
          %v841 = vcvt.s32.f32 %v777
          %v842 = vcvt.s32.f32 %v778
          %v843 = vcvt.s32.f32 %v779
          %v844 = vcvt.s32.f32 %v780
          %v845 = vcvt.s32.f32 %v781
          %v846 = vcvt.s32.f32 %v782
          %v847 = vcvt.s32.f32 %v783
          %v848 = vcvt.s32.f32 %v784
          %v849 = vcvt.s32.f32 %v785
          %v850 = vcvt.s32.f32 %v786
          %v851 = vcvt.s32.f32 %v787
          %v852 = vcvt.s32.f32 %v788
          %v853 = vcvt.s32.f32 %v789
          %v854 = vcvt.s32.f32 %v790
          %v855 = vcvt.s32.f32 %v791
          %v856 = vcvt.s32.f32 %v792
          %v857 = vcvt.s32.f32 %v793
          %v858 = vcvt.s32.f32 %v794
          %v859 = vcvt.s32.f32 %v795
          %v860 = vcvt.s32.f32 %v796
          %v861 = vcvt.s32.f32 %v797
          %v862 = vcvt.s32.f32 %v798
          %v863 = vcvt.s32.f32 %v799
          %v864 = vcvt.s32.f32 %v800
          %v865 = vcvt.s32.f32 %v801
          %v866 = vcvt.s32.f32 %v802
          %v867 = vcvt.s32.f32 %v803
          %v868 = vcvt.s32.f32 %v804
          %v869 = vcvt.s32.f32 %v805
          %v870 = vcvt.s32.f32 %v806
          %v871 = vpack.c.bf16 %v809, %v807
          %v872 = vpack.c.bf16 %v810, %v808
          %v873 = vpack.c.bf16 %v813, %v811
          %v874 = vpack.c.bf16 %v814, %v812
          %v875 = vpack.c.bf16 %v817, %v815
          %v876 = vpack.c.bf16 %v818, %v816
          %v877 = vpack.c.bf16 %v821, %v819
          %v878 = vpack.c.bf16 %v822, %v820
          %v879 = vpack.c.bf16 %v825, %v823
          %v880 = vpack.c.bf16 %v826, %v824
          %v881 = vpack.c.bf16 %v829, %v827
          %v882 = vpack.c.bf16 %v830, %v828
          %v883 = vpack.c.bf16 %v833, %v831
          %v884 = vpack.c.bf16 %v834, %v832
          %v885 = vpack.c.bf16 %v837, %v835
          %v886 = vpack.c.bf16 %v838, %v836
          %v887 = vpack.c.bf16 %v841, %v839
          %v888 = vpack.c.bf16 %v842, %v840
          %v889 = vpack.c.bf16 %v845, %v843
          %v890 = vpack.c.bf16 %v846, %v844
          %v891 = vpack.c.bf16 %v849, %v847
          %v892 = vpack.c.bf16 %v850, %v848
          %v893 = vpack.c.bf16 %v853, %v851
          %v894 = vpack.c.bf16 %v854, %v852
          %v895 = vpack.c.bf16 %v857, %v855
          %v896 = vpack.c.bf16 %v858, %v856
          %v897 = vpack.c.bf16 %v861, %v859
          %v898 = vpack.c.bf16 %v862, %v860
          %v899 = vpack.c.bf16 %v865, %v863
          %v900 = vpack.c.bf16 %v866, %v864
          %v901 = vpack.c.bf16 %v869, %v867
          %v902 = vpack.c.bf16 %v870, %v868
          %v903 = vld [vmem:[%s243] sm:$0xff]
          %v904 = vld [vmem:[%s243 + $0x8] sm:$0xff]
          %v905 = vld [vmem:[%s243 + $0x10] sm:$0xff]
          %v906 = vld [vmem:[%s243 + $0x18] sm:$0xff]
          %v907 = vld [vmem:[%s252] sm:$0xff]
          %v908 = vld [vmem:[%s252 + $0x8] sm:$0xff]
          %v909 = vld [vmem:[%s252 + $0x10] sm:$0xff]
          %v910 = vld [vmem:[%s252 + $0x18] sm:$0xff]
          %v915 = vunpack.c.l.b16 %v907
          %v916 = vunpack.c.h.b16 %v907
          %v917 = vunpack.c.l.b16 %v908
          %v918 = vunpack.c.h.b16 %v908
          %v919 = vunpack.c.l.b16 %v909
          %v920 = vunpack.c.h.b16 %v909
          %v921 = vunpack.c.l.b16 %v910
          %v922 = vunpack.c.h.b16 %v910
          %v923 = vpack.c.b16 %v917, %v915
          %v924 = vpack.c.b16 %v918, %v916
          %v925 = vpack.c.b16 %v921, %v919
          %v926 = vpack.c.b16 %v922, %v920
          %931 = vmatprep.subr.bf16.mxu0 %v886
          %932 = vmatpush1.bf16.msra.mxu0 %v885
          %933 = vmatprep.subr.bf16.mxu0 %v884
          %934 = vmatpush1.bf16.msra.mxu0 %v883
          %935 = vmatprep.subr.bf16.mxu0 %v882
          %936 = vmatpush1.bf16.msra.mxu0 %v881
          %937 = vmatprep.subr.bf16.mxu0 %v880
          %938 = vmatpush1.bf16.msra.mxu0 %v879
          %939 = vmatprep.subr.bf16.mxu0 %v878
          %940 = vmatpush1.bf16.msra.mxu0 %v877
          %941 = vmatprep.subr.bf16.mxu0 %v876
          %942 = vmatpush1.bf16.msra.mxu0 %v875
          %943 = vmatprep.subr.bf16.mxu0 %v874
          %944 = vmatpush1.bf16.msra.mxu0 %v873
          %945 = vmatprep.subr.bf16.mxu0 %v872
          %946 = vmatpush1.bf16.msra.mxu0 %v871
          %947 = vmatprep.subr.bf16.mxu0 %v902
          %948 = vmatpush2.bf16.msra.mxu0 %v901
          %949 = vmatprep.subr.bf16.mxu0 %v900
          %950 = vmatpush2.bf16.msra.mxu0 %v899
          %951 = vmatprep.subr.bf16.mxu0 %v898
          %952 = vmatpush2.bf16.msra.mxu0 %v897
          %953 = vmatprep.subr.bf16.mxu0 %v896
          %954 = vmatpush2.bf16.msra.mxu0 %v895
          %955 = vmatprep.subr.bf16.mxu0 %v894
          %956 = vmatpush2.bf16.msra.mxu0 %v893
          %957 = vmatprep.subr.bf16.mxu0 %v892
          %958 = vmatpush2.bf16.msra.mxu0 %v891
          %959 = vmatprep.subr.bf16.mxu0 %v890
          %960 = vmatpush2.bf16.msra.mxu0 %v889
          %961 = vmatprep.subr.bf16.mxu0 %v888
          %962 = vmatpush2.bf16.msra.mxu0 %v887
          %963 = vmatprep.mubr.bf16.mxu0 %v924
          %964 = vmatmul.mubr.bf16.gmra.mxu0 %v923
          %v965 = vpop.f32.mrf.mxu0
          %v966 = vadd.f32 0.0, %v965
          %v967 = vpop.f32.mrf.mxu0
          %v968 = vadd.f32 0.0, %v967
          %v969 = vpop.f32.mrf.mxu0
          %v970 = vadd.f32 0.0, %v969
          %v971 = vpop.f32.mrf.mxu0
          %v972 = vadd.f32 0.0, %v971
          %973 = vmatprep.mubr.bf16.mxu0 %v926
          %974 = vmatmul.mubr.bf16.gmra.mxu0 %v925
          %v975 = vpop.f32.mrf.mxu0
          %v976 = vadd.f32 0.0, %v975
          %v977 = vpop.f32.mrf.mxu0
          %v978 = vadd.f32 0.0, %v977
          %v979 = vpop.f32.mrf.mxu0
          %v980 = vadd.f32 0.0, %v979
          %v981 = vpop.f32.mrf.mxu0
          %v982 = vadd.f32 0.0, %v981
          %983 = vdwg.mxu0
          %v988 = vunpack.c.l.b16 %v903
          %v989 = vunpack.c.h.b16 %v903
          %v990 = vunpack.c.l.b16 %v904
          %v991 = vunpack.c.h.b16 %v904
          %v992 = vunpack.c.l.b16 %v905
          %v993 = vunpack.c.h.b16 %v905
          %v994 = vunpack.c.l.b16 %v906
          %v995 = vunpack.c.h.b16 %v906
          %v996 = vpack.c.b16 %v990, %v988
          %v997 = vpack.c.b16 %v991, %v989
          %v998 = vpack.c.b16 %v994, %v992
          %v999 = vpack.c.b16 %v995, %v993
          %1004 = vmatprep.subr.bf16.mxu0 %v630
          %1005 = vmatpush1.bf16.msra.mxu0 %v629
          %1006 = vmatprep.subr.bf16.mxu0 %v628
          %1007 = vmatpush1.bf16.msra.mxu0 %v627
          %1008 = vmatprep.subr.bf16.mxu0 %v626
          %1009 = vmatpush1.bf16.msra.mxu0 %v625
          %1010 = vmatprep.subr.bf16.mxu0 %v624
          %1011 = vmatpush1.bf16.msra.mxu0 %v623
          %1012 = vmatprep.subr.bf16.mxu0 %v622
          %1013 = vmatpush1.bf16.msra.mxu0 %v621
          %1014 = vmatprep.subr.bf16.mxu0 %v620
          %1015 = vmatpush1.bf16.msra.mxu0 %v619
          %1016 = vmatprep.subr.bf16.mxu0 %v618
          %1017 = vmatpush1.bf16.msra.mxu0 %v617
          %1018 = vmatprep.subr.bf16.mxu0 %v616
          %1019 = vmatpush1.bf16.msra.mxu0 %v615
          %1020 = vmatprep.subr.bf16.mxu0 %v646
          %1021 = vmatpush2.bf16.msra.mxu0 %v645
          %1022 = vmatprep.subr.bf16.mxu0 %v644
          %1023 = vmatpush2.bf16.msra.mxu0 %v643
          %1024 = vmatprep.subr.bf16.mxu0 %v642
          %1025 = vmatpush2.bf16.msra.mxu0 %v641
          %1026 = vmatprep.subr.bf16.mxu0 %v640
          %1027 = vmatpush2.bf16.msra.mxu0 %v639
          %1028 = vmatprep.subr.bf16.mxu0 %v638
          %1029 = vmatpush2.bf16.msra.mxu0 %v637
          %1030 = vmatprep.subr.bf16.mxu0 %v636
          %1031 = vmatpush2.bf16.msra.mxu0 %v635
          %1032 = vmatprep.subr.bf16.mxu0 %v634
          %1033 = vmatpush2.bf16.msra.mxu0 %v633
          %1034 = vmatprep.subr.bf16.mxu0 %v632
          %1035 = vmatpush2.bf16.msra.mxu0 %v631
          %1036 = vmatprep.mubr.bf16.mxu0 %v997
          %1037 = vmatmul.mubr.bf16.gmra.mxu0 %v996
          %v1038 = vpop.f32.mrf.mxu0
          %v1039 = vadd.f32 %v966, %v1038
          %v1040 = vpop.f32.mrf.mxu0
          %v1041 = vadd.f32 %v968, %v1040
          %v1042 = vpop.f32.mrf.mxu0
          %v1043 = vadd.f32 %v970, %v1042
          %v1044 = vpop.f32.mrf.mxu0
          %v1045 = vadd.f32 %v972, %v1044
          %1046 = vmatprep.mubr.bf16.mxu0 %v999
          %1047 = vmatmul.mubr.bf16.gmra.mxu0 %v998
          %v1048 = vpop.f32.mrf.mxu0
          %v1049 = vadd.f32 %v976, %v1048
          %v1050 = vpop.f32.mrf.mxu0
          %v1051 = vadd.f32 %v978, %v1050
          %v1052 = vpop.f32.mrf.mxu0
          %v1053 = vadd.f32 %v980, %v1052
          %v1054 = vpop.f32.mrf.mxu0
          %v1055 = vadd.f32 %v982, %v1054
          %1056 = vdwg.mxu0
          %1058 = vset.pattern.permute.xlu0 0
          %1059 = vperm.xlu0 %1058, %v309
          %v1060 = vpop.permute.xlu0 %1059
          %1063 = vset.pattern.permute.xlu0 0
          %1064 = vperm.xlu0 %1063, %v310
          %v1065 = vpop.permute.xlu0 %1064
          %1068 = vset.pattern.permute.xlu0 0
          %1069 = vperm.xlu0 %1068, %v311
          %v1070 = vpop.permute.xlu0 %1069
          %1073 = vset.pattern.permute.xlu0 0
          %1074 = vperm.xlu0 %1073, %v312
          %v1075 = vpop.permute.xlu0 %1074
          %v1077 = vadd.f32 %v1039, %v1060
          %v1078 = vadd.f32 %v1041, %v1060
          %v1079 = vadd.f32 %v1043, %v1065
          %v1080 = vadd.f32 %v1045, %v1065
          %v1081 = vadd.f32 %v1049, %v1070
          %v1082 = vadd.f32 %v1051, %v1070
          %v1083 = vadd.f32 %v1053, %v1075
          %v1084 = vadd.f32 %v1055, %v1075
          %v1085 = vpack.c.bf16 %v1079, %v1077
          %v1086 = vpack.c.bf16 %v1080, %v1078
          %v1087 = vpack.c.bf16 %v1083, %v1081
          %v1088 = vpack.c.bf16 %v1084, %v1082
          %v1093 = vunpack.c.l.b16 %v1085
          %v1094 = vunpack.c.l.b16 %v1086
          %v1095 = vunpack.c.h.b16 %v1085
          %v1096 = vunpack.c.h.b16 %v1086
          %v1097 = vunpack.c.l.b16 %v1087
          %v1098 = vunpack.c.l.b16 %v1088
          %v1099 = vunpack.c.h.b16 %v1087
          %v1100 = vunpack.c.h.b16 %v1088
          %v1101 = vpack.c.b16 %v1094, %v1093
          %v1102 = vpack.c.b16 %v1096, %v1095
          %v1103 = vpack.c.b16 %v1098, %v1097
          %v1104 = vpack.c.b16 %v1100, %v1099
          %1109 = vst [vmem:[%s285] sm:$0xff] %v1101
          %1110 = vst [vmem:[%s285 + $0x8] sm:$0xff] %v1102
          %1111 = vst [vmem:[%s285 + $0x10] sm:$0xff] %v1103
          %1112 = vst [vmem:[%s285 + $0x18] sm:$0xff] %v1104
        $region52: #{tpu_custom_call.1} parent=35 // pred_fallthru
          _
        %s1113 = sand.u32 %s144, 1
        %s1114 = scalar_lea.sflag [#allocation6], %s1113
        %s1115 = sand.u32 %s144, 1
        %s1116 = smul.addr %s1115, 32
        %s1117 = scalar_lea.vmem [#allocation9], %s1116
        // Predicated region
        $region53: #{tpu_custom_call.1} parent=35 // pred_check
          %p1118 = pneg %p154
        $region54: #{tpu_custom_call.1} parent=35 // pred_check_branch
          %1120 = sbr.rel (%p1118) target = $region56
        $region55: #{tpu_custom_call.1} parent=35 // pred_region
          %s1121 = smul.u32 2, %s31
          %s1123 = ssub.s32 512, 512
          %1124 = vsyncadd %s1114, %s1123
          %s1125 = smul.addr %s1121, 64
          %s1126 = scalar_lea.hbm %s5, %s1125
          %s1127 = sshll.u32 %s1117, 4
          %s1128 = int_to_ptr.vmem [resolvable:$true] %s1127
          %1133 = dma.vmem_to_hbm [thread:$0]  %s1128, 512, %s1126, %s1114, 128, 256, 8
        $region56: #{tpu_custom_call.1} parent=35 // pred_fallthru
          _
      $region36: #{tpu_custom_call.1} parent=5 // pred_fallthru
        _
      %p1134 = scmp.le.s32.totalorder 2, %s26
      // Predicated region
      $region57: #{tpu_custom_call.1} parent=5 // pred_check
        %p1135 = pneg %p1134
      $region58: #{tpu_custom_call.1} parent=5 // pred_check_branch
        %1137 = sbr.rel (%p1135) target = $region60
      $region59: #{tpu_custom_call.1} parent=5 // pred_region
        %s1138 = ssub.s32 %s26, 2
        // Predicated region
        $region61: #{tpu_custom_call.1} parent=59 // pred_check
          %p1139 = pneg %p160
        $region62: #{tpu_custom_call.1} parent=59 // pred_check_branch
          %1141 = sbr.rel (%p1139) target = $region64
        $region63: #{tpu_custom_call.1} parent=59 // pred_region
          %s1142 = sand.u32 %s145, 1
          %s1143 = scalar_lea.sflag [#allocation6], %s1142
          %s1144 = sand.u32 %s145, 1
          %s1145 = smul.addr %s1144, 32
          %s1146 = scalar_lea.vmem [#allocation9], %s1145
          %1147 = dma.done %s1143, 512
        $region64: #{tpu_custom_call.1} parent=59 // pred_fallthru
          _
      $region60: #{tpu_custom_call.1} parent=5 // pred_fallthru
        _
    $region6: #{tpu_custom_call.1} parent=1 // loop_footer
      %s30 = sadd.s32 1, %s26
    $region7: #{tpu_custom_call.1} parent=1 // loop_footer_branch
      %25 = sbr.rel target = $region3
    $region8: #{tpu_custom_call.1} parent=1 // loop_exit
      _
    %1148 = vsyncpa [#allocation5], 1
    %s1149 = scalar_lea.sflag [#allocation5], 1
    %1150 = vsyncpa %s1149, 1
    %1151 = vsyncpa [#allocation8], 1
    %s1152 = scalar_lea.sflag [#allocation8], 1
    %1153 = vsyncpa %s1152, 1
    %1154 = vsyncpa [#allocation6], 1
    %s1155 = scalar_lea.sflag [#allocation6], 1
    %1156 = vsyncpa %s1155, 1

</llo_original>
